<compile_context>
chip_gen: v7x
topology: tpu7x:2x2x1
jax: 0.10.0
libtpu: 0.0.40
codegen_flags: <defaults>
</compile_context>

<pallas_src>
import functools

import jax
import jax.numpy as jnp
from jax import lax
from jax.experimental import pallas as pl
from jax.experimental.pallas import tpu as pltpu

HOP_LENGTH = 512      # BiquadBaseFunctional.hop_length (params are frame-constant)


def biquad_kernel(coef_ref, x_ref, y_ref, state_ref, *, in_channels):
    """One time block of the biquad recursion + in-channel reduction.

    coef_ref : (8, RG)        rows 0..5 = b0, b1(=a1), b2, a2, c1, c2
    x_ref    : (block_t, RG)  current time block of input rows (time-major)
    y_ref    : (block_t, 128) output block (summed over in_channels)
    state_ref: (4, RG)        persistent state across time blocks
                              rows: 0=x1, 1=x2, 2=y1, 3=y2
    """
    block_t = x_ref.shape[0]
    n_chunks = block_t // 8

    # Zero the filter state at the start of each column group's time sweep.
    @pl.when(pl.program_id(1) == 0)
    def _():
        state_ref[...] = jnp.zeros_like(state_ref)

    b0 = coef_ref[0:1, :]
    b1 = coef_ref[1:2, :]      # a1 == b1 for the peak EQ (deduplicated)
    b2 = coef_ref[2:3, :]
    a2 = coef_ref[3:4, :]
    c1 = coef_ref[4:5, :]      # a1*a1 - a2
    c2 = coef_ref[5:6, :]      # a1*a2

    x1 = state_ref[0:1, :]
    x2 = state_ref[1:2, :]
    y1 = state_ref[2:3, :]
    y2 = state_ref[3:4, :]

    def chunk_body(c, carry):
        x1, x2, y1, y2 = carry
        t0 = pl.multiple_of(c * 8, 8)
        xb = x_ref[pl.ds(t0, 8), :]                     # one tiled (8, RG) load

        # --- FIR (feedforward) part: dense over the whole chunk, off-chain ---
        xm1 = jnp.concatenate([x1, xb[0:7, :]], axis=0)       # x[n-1]
        xm2 = jnp.concatenate([x2, x1, xb[0:6, :]], axis=0)   # x[n-2]
        v = b0 * xb + b1 * xm1 + b2 * xm2               # (8, RG)

        # --- 2-sample look-ahead recursion: 4 dependent steps per chunk -----
        for k in range(4):
            v_e = v[2 * k:2 * k + 1, :]
            v_o = v[2 * k + 1:2 * k + 2, :]
            w_o = v_o - b1 * v_e                        # dense, off the chain
            y_e = v_e - b1 * y1 - a2 * y2               # y[n]
            y_o = w_o + c1 * y1 + c2 * y2               # y[n+1]
            # fused in-channel reduction; groups are 128-lane aligned
            red_e = y_e[:, 0:128]
            red_o = y_o[:, 0:128]
            for i in range(1, in_channels):
                red_e = red_e + y_e[:, i * 128:(i + 1) * 128]
                red_o = red_o + y_o[:, i * 128:(i + 1) * 128]
            # direct row stores (vst slots are far from saturated here)
            y_ref[pl.ds(t0 + 2 * k, 1), :] = red_e
            y_ref[pl.ds(t0 + 2 * k + 1, 1), :] = red_o
            y2 = y_e
            y1 = y_o
        x2 = xb[6:7, :]
        x1 = xb[7:8, :]
        return (x1, x2, y1, y2)

    x1, x2, y1, y2 = lax.fori_loop(0, n_chunks, chunk_body, (x1, x2, y1, y2))

    # write back filter state for the next time block
    state_ref[0:1, :] = x1
    state_ref[1:2, :] = x2
    state_ref[2:3, :] = y1
    state_ref[3:4, :] = y2


def biquad_forward_pallas(x, freq_p, gain_p, q_p, hop=HOP_LENGTH, block_t=2048):
    """x: (batch, in_channels, T); params: (out_channels, in_channels)."""
    batch, c_in, T = x.shape
    c_out = freq_p.shape[0]

    BO = batch * c_out
    G = pl.cdiv(BO, 128)                 # 128-lane output column groups
    BO_pad = G * 128
    RG = c_in * 128                      # per-group input width (128-aligned groups)
    R_pad = G * RG

    # time block size: multiple of 8, divides T_pad
    block_t = max(8, min(block_t, T))
    block_t = 8 * pl.cdiv(block_t, 8)
    n_tblocks = pl.cdiv(T, block_t)
    T_pad = n_tblocks * block_t

    # --- direct-form coefficients (BiquadPeakFunctional), frame-constant -----
    freq_f = freq_p.astype(jnp.float32)
    gain_f = gain_p.astype(jnp.float32)
    q_f = q_p.astype(jnp.float32)
    omega = jnp.pi * freq_f
    A = jnp.power(10.0, 0.025 * gain_f)
    alpha = 0.5 * jnp.sin(omega) / q_f
    cosw = jnp.cos(omega)
    a0 = 1.0 + alpha / A
    b0 = (1.0 + alpha * A) / a0
    b1 = (-2.0 * cosw) / a0              # a1 == b1
    b2 = (1.0 - alpha * A) / a0
    a2 = (1.0 - alpha / A) / a0
    c1 = b1 * b1 - a2                    # look-ahead coefficients
    c2 = b1 * a2
    zeros = jnp.zeros_like(b0)

    def expand_to_lanes(p, pad_value):
        # (c_out, c_in) -> (R_pad,) with col = (g*c_in + i)*128 + l, bo = g*128 + l
        rows = jnp.broadcast_to(p.T[:, None, :], (c_in, batch, c_out)).reshape(c_in, BO)
        rows = jnp.pad(rows, ((0, 0), (0, BO_pad - BO)), constant_values=pad_value)
        rows = rows.reshape(c_in, G, 128).transpose(1, 0, 2).reshape(R_pad)
        return rows.astype(jnp.float32)

    coef_rows = jnp.stack(
        [expand_to_lanes(b0, 1.0),       # identity filter on padded lanes
         expand_to_lanes(b1, 0.0),
         expand_to_lanes(b2, 0.0),
         expand_to_lanes(a2, 0.0),
         expand_to_lanes(c1, 0.0),
         expand_to_lanes(c2, 0.0),
         expand_to_lanes(zeros, 0.0),
         expand_to_lanes(zeros, 0.0)], axis=0)                  # (8, R_pad)

    # --- input rows ----------------------------------------------------------
    # TODO(synk): x is duplicated across out_channels in HBM; in-kernel reuse of
    # one x vreg against c_out coefficient vregs would remove this blow-up.
    x_exp = jnp.broadcast_to(x[:, None, :, :], (batch, c_out, c_in, T))   # (b,o,i,T)
    x_r = jnp.transpose(x_exp, (2, 0, 1, 3)).reshape(c_in, BO, T)
    x_r = jnp.pad(x_r, ((0, 0), (0, BO_pad - BO), (0, 0)))
    x_rows = jnp.transpose(x_r.reshape(c_in, G, 128, T), (3, 1, 0, 2)).reshape(T, R_pad)
    x_rows = jnp.pad(x_rows.astype(jnp.float32), ((0, T_pad - T), (0, 0)))  # (T_pad, R_pad)

    kernel = functools.partial(biquad_kernel, in_channels=c_in)

    y2d = pl.pallas_call(
        kernel,
        out_shape=jax.ShapeDtypeStruct((T_pad, BO_pad), jnp.float32),
        grid=(G, n_tblocks),
        in_specs=[
            pl.BlockSpec((8, RG), lambda g, t: (0, g)),            # coef (tiny, resident)
            pl.BlockSpec((block_t, RG), lambda g, t: (t, g)),      # x (pipelined)
        ],
        out_specs=pl.BlockSpec((block_t, 128), lambda g, t: (t, g)),
        scratch_shapes=[pltpu.VMEM((4, RG), jnp.float32)],         # x1,x2,y1,y2
        compiler_params=pltpu.CompilerParams(
            dimension_semantics=("parallel", "arbitrary")),        # time stays sequential
    )(coef_rows, x_rows)

    # columns are ordered bo = b*c_out + o; trim time + lane padding
    y = y2d[:T, :BO].T.reshape(batch, c_out, T)
    return y


def biquad_forward_reference(x, freq_p, gain_p, q_p, hop=HOP_LENGTH):
    """Pure-JAX reference: exact sequential biquad recursion + in-channel sum."""
    batch, c_in, T = x.shape
    c_out = freq_p.shape[0]

    omega = jnp.pi * freq_p
    A = 10.0 ** (0.025 * gain_p)
    alpha = 0.5 * jnp.sin(omega) / q_p
    a0 = 1.0 + alpha / A
    b0 = (1.0 + alpha * A) / a0
    b1 = -2.0 * jnp.cos(omega) / a0
    b2 = (1.0 - alpha * A) / a0
    a1 = b1
    a2 = (1.0 - alpha / A) / a0

    def bc(p):
        return jnp.broadcast_to(p[None, :, :], (batch, c_out, c_in)).astype(jnp.float32)

    b0r, b1r, b2r, a1r, a2r = map(bc, (b0, b1, b2, a1, a2))
    x_exp = jnp.broadcast_to(x[:, None, :, :], (batch, c_out, c_in, T))
    xs = jnp.moveaxis(x_exp, -1, 0).astype(jnp.float32)   # (T, b, o, i)

    def step(carry, xt):
        x1, x2, y1, y2 = carry
        y0 = b0r * xt + b1r * x1 + b2r * x2 - a1r * y1 - a2r * y2
        return (xt, x1, y0, y1), y0

    z = jnp.zeros((batch, c_out, c_in), jnp.float32)
    _, ys = lax.scan(step, (z, z, z, z), xs)
    y = jnp.moveaxis(ys, 0, -1).sum(axis=2)                # (batch, c_out, T)
    return y


if __name__ == "__main__":
    batch, in_channels, out_channels, timesteps = 2, 2, 3, 1024  # n_frames = 2

    key = jax.random.PRNGKey(0)
    k_freq, k_x = jax.random.split(key)

    # Parameters (shapes from BiquadModule.__init__): freq ~ U[0,1), Q = 0.7071.
    # gain_dB is set nonzero (emulates set_gain_dB) so the filter is not identity.
    freq_p = jax.random.uniform(k_freq, (out_channels, in_channels), jnp.float32)
    gain_p = jnp.full((out_channels, in_channels), 3.0, jnp.float32)
    q_p = jnp.full((out_channels, in_channels), 0.7071, jnp.float32)

    x = jax.random.normal(k_x, (batch, in_channels, timesteps), jnp.float32)

    run = jax.jit(functools.partial(biquad_forward_pallas, block_t=512))
    y = jax.block_until_ready(run(x, freq_p, gain_p, q_p))

    y_ref = jax.block_until_ready(
        jax.jit(biquad_forward_reference)(x, freq_p, gain_p, q_p))

    assert y.shape == (batch, out_channels, timesteps), y.shape
    max_err = float(jnp.max(jnp.abs(y - y_ref)))
    assert max_err < 1e-4, f"max abs error vs reference: {max_err}"

    print("KERNEL_OK")
</pallas_src>

<mosaic_0001>
module attributes {stable_mosaic.version = 11 : i64} {
  func.func @biquad_kernel(%arg0: i32, %arg1: i32, %arg2: memref<8x256xf32, #tpu.memory_space<vmem>>, %arg3: memref<512x256xf32, #tpu.memory_space<vmem>>, %arg4: memref<512x128xf32, #tpu.memory_space<vmem>>, %arg5: memref<4x256xf32, #tpu.memory_space<vmem>>) attributes {dimension_semantics = [#tpu.dimension_semantics<parallel>, #tpu.dimension_semantics<arbitrary>], iteration_bounds = array<i64: 1, 2>, scalar_prefetch = 0 : i64, scratch_operands = 1 : i64, tpu.core_type = #tpu.core_type<tc>, window_params = [{transform_indices = @transform_0, window_bounds = array<i64: 8, 256>}, {transform_indices = @transform_1, window_bounds = array<i64: 512, 256>}, {transform_indices = @transform_2, window_bounds = array<i64: 512, 128>}]} {
    %c0_i32 = arith.constant 0 : i32
    %0 = arith.cmpi eq, %arg1, %c0_i32 : i32
    %1 = arith.extui %0 : i1 to i32
    %c0_i32_0 = arith.constant 0 : i32
    %2 = arith.cmpi ne, %1, %c0_i32_0 : i32
    scf.if %2 {
      %cst = arith.constant 0.000000e+00 : f32
      %19 = vector.broadcast %cst : f32 to vector<4x256xf32>
      %c0_25 = arith.constant 0 : index
      %c0_26 = arith.constant 0 : index
      %20 = vector.load %arg5[%c0_25, %c0_26] : memref<4x256xf32, #tpu.memory_space<vmem>>, vector<4x256xf32>
      tpu.vector_store %arg5[%c0_25, %c0_26], %19 {strides = array<i32>} : memref<4x256xf32, #tpu.memory_space<vmem>>, vector<4x256xf32>,
    } else {
    }
    %c0 = arith.constant 0 : index
    %c0_1 = arith.constant 0 : index
    %3 = vector.load %arg2[%c0, %c0_1] : memref<8x256xf32, #tpu.memory_space<vmem>>, vector<1x256xf32>
    %c1 = arith.constant 1 : index
    %c0_2 = arith.constant 0 : index
    %4 = vector.load %arg2[%c1, %c0_2] : memref<8x256xf32, #tpu.memory_space<vmem>>, vector<1x256xf32>
    %c2 = arith.constant 2 : index
    %c0_3 = arith.constant 0 : index
    %5 = vector.load %arg2[%c2, %c0_3] : memref<8x256xf32, #tpu.memory_space<vmem>>, vector<1x256xf32>
    %c3 = arith.constant 3 : index
    %c0_4 = arith.constant 0 : index
    %6 = vector.load %arg2[%c3, %c0_4] : memref<8x256xf32, #tpu.memory_space<vmem>>, vector<1x256xf32>
    %c4 = arith.constant 4 : index
    %c0_5 = arith.constant 0 : index
    %7 = vector.load %arg2[%c4, %c0_5] : memref<8x256xf32, #tpu.memory_space<vmem>>, vector<1x256xf32>
    %c5 = arith.constant 5 : index
    %c0_6 = arith.constant 0 : index
    %8 = vector.load %arg2[%c5, %c0_6] : memref<8x256xf32, #tpu.memory_space<vmem>>, vector<1x256xf32>
    %c0_7 = arith.constant 0 : index
    %c0_8 = arith.constant 0 : index
    %9 = vector.load %arg5[%c0_7, %c0_8] : memref<4x256xf32, #tpu.memory_space<vmem>>, vector<1x256xf32>
    %c1_9 = arith.constant 1 : index
    %c0_10 = arith.constant 0 : index
    %10 = vector.load %arg5[%c1_9, %c0_10] : memref<4x256xf32, #tpu.memory_space<vmem>>, vector<1x256xf32>
    %c2_11 = arith.constant 2 : index
    %c0_12 = arith.constant 0 : index
    %11 = vector.load %arg5[%c2_11, %c0_12] : memref<4x256xf32, #tpu.memory_space<vmem>>, vector<1x256xf32>
    %c3_13 = arith.constant 3 : index
    %c0_14 = arith.constant 0 : index
    %12 = vector.load %arg5[%c3_13, %c0_14] : memref<4x256xf32, #tpu.memory_space<vmem>>, vector<1x256xf32>
    %c0_i32_15 = arith.constant 0 : i32
    %c64_i32 = arith.constant 64 : i32
    %13 = arith.addi %c0_i32_15, %c64_i32 : i32
    %c1_i32 = arith.constant 1 : i32
    %14:4 = scf.for %arg6 = %c0_i32_15 to %13 step %c1_i32 iter_args(%arg7 = %9, %arg8 = %10, %arg9 = %11, %arg10 = %12) -> (vector<1x256xf32>, vector<1x256xf32>, vector<1x256xf32>, vector<1x256xf32>)  : i32 {
      %c8_i32 = arith.constant 8 : i32
      %19 = arith.muli %arg6, %c8_i32 : i32
      %20 = tpu.assume_multiple %19, 8 : i32
      %21 = arith.index_cast %20 : i32 to index
      %c0_25 = arith.constant 0 : index
      %22 = vector.load %arg3[%21, %c0_25] : memref<512x256xf32, #tpu.memory_space<vmem>>, vector<8x256xf32>
      %23 = vector.extract_strided_slice %22 {offsets = [0, 0], sizes = [7, 256], strides = [1, 1]} : vector<8x256xf32> to vector<7x256xf32>
      %24 = tpu.concatenate %arg7, %23 in 0 : vector<1x256xf32>, vector<7x256xf32> -> vector<8x256xf32>
      %25 = vector.extract_strided_slice %22 {offsets = [0, 0], sizes = [6, 256], strides = [1, 1]} : vector<8x256xf32> to vector<6x256xf32>
      %26 = tpu.concatenate %arg8, %arg7, %25 in 0 : vector<1x256xf32>, vector<1x256xf32>, vector<6x256xf32> -> vector<8x256xf32>
      %27 = vector.broadcast %3 : vector<1x256xf32> to vector<8x256xf32>
      %28 = arith.mulf %27, %22 : vector<8x256xf32>
      %29 = vector.broadcast %4 : vector<1x256xf32> to vector<8x256xf32>
      %30 = arith.mulf %29, %24 : vector<8x256xf32>
      %31 = arith.addf %28, %30 : vector<8x256xf32>
      %32 = vector.broadcast %5 : vector<1x256xf32> to vector<8x256xf32>
      %33 = arith.mulf %32, %26 : vector<8x256xf32>
      %34 = arith.addf %31, %33 : vector<8x256xf32>
      %35 = vector.extract_strided_slice %34 {offsets = [0, 0], sizes = [1, 256], strides = [1, 1]} : vector<8x256xf32> to vector<1x256xf32>
      %36 = vector.extract_strided_slice %34 {offsets = [1, 0], sizes = [1, 256], strides = [1, 1]} : vector<8x256xf32> to vector<1x256xf32>
      %37 = arith.mulf %4, %35 : vector<1x256xf32>
      %38 = arith.subf %36, %37 : vector<1x256xf32>
      %39 = arith.mulf %4, %arg9 : vector<1x256xf32>
      %40 = arith.subf %35, %39 : vector<1x256xf32>
      %41 = arith.mulf %6, %arg10 : vector<1x256xf32>
      %42 = arith.subf %40, %41 : vector<1x256xf32>
      %43 = arith.mulf %7, %arg9 : vector<1x256xf32>
      %44 = arith.addf %38, %43 : vector<1x256xf32>
      %45 = arith.mulf %8, %arg10 : vector<1x256xf32>
      %46 = arith.addf %44, %45 : vector<1x256xf32>
      %47 = vector.extract_strided_slice %42 {offsets = [0, 0], sizes = [1, 128], strides = [1, 1]} : vector<1x256xf32> to vector<1x128xf32>
      %48 = vector.extract_strided_slice %46 {offsets = [0, 0], sizes = [1, 128], strides = [1, 1]} : vector<1x256xf32> to vector<1x128xf32>
      %49 = vector.extract_strided_slice %42 {offsets = [0, 128], sizes = [1, 128], strides = [1, 1]} : vector<1x256xf32> to vector<1x128xf32>
      %50 = arith.addf %47, %49 : vector<1x128xf32>
      %51 = vector.extract_strided_slice %46 {offsets = [0, 128], sizes = [1, 128], strides = [1, 1]} : vector<1x256xf32> to vector<1x128xf32>
      %52 = arith.addf %48, %51 : vector<1x128xf32>
      %c0_i32_26 = arith.constant 0 : i32
      %53 = arith.addi %20, %c0_i32_26 : i32
      %54 = arith.index_cast %53 : i32 to index
      %c0_27 = arith.constant 0 : index
      %55 = vector.load %arg4[%54, %c0_27] : memref<512x128xf32, #tpu.memory_space<vmem>>, vector<1x128xf32>
      tpu.vector_store %arg4[%54, %c0_27], %50 {strides = array<i32>} : memref<512x128xf32, #tpu.memory_space<vmem>>, vector<1x128xf32>,
      %c0_i32_28 = arith.constant 0 : i32
      %56 = arith.addi %20, %c0_i32_28 : i32
      %c1_i32_29 = arith.constant 1 : i32
      %57 = arith.addi %56, %c1_i32_29 : i32
      %58 = arith.index_cast %57 : i32 to index
      %c0_30 = arith.constant 0 : index
      %59 = vector.load %arg4[%58, %c0_30] : memref<512x128xf32, #tpu.memory_space<vmem>>, vector<1x128xf32>
      tpu.vector_store %arg4[%58, %c0_30], %52 {strides = array<i32>} : memref<512x128xf32, #tpu.memory_space<vmem>>, vector<1x128xf32>,
      %60 = vector.extract_strided_slice %34 {offsets = [2, 0], sizes = [1, 256], strides = [1, 1]} : vector<8x256xf32> to vector<1x256xf32>
      %61 = vector.extract_strided_slice %34 {offsets = [3, 0], sizes = [1, 256], strides = [1, 1]} : vector<8x256xf32> to vector<1x256xf32>
      %62 = arith.mulf %4, %60 : vector<1x256xf32>
      %63 = arith.subf %61, %62 : vector<1x256xf32>
      %64 = arith.mulf %4, %46 : vector<1x256xf32>
      %65 = arith.subf %60, %64 : vector<1x256xf32>
      %66 = arith.mulf %6, %42 : vector<1x256xf32>
      %67 = arith.subf %65, %66 : vector<1x256xf32>
      %68 = arith.mulf %7, %46 : vector<1x256xf32>
      %69 = arith.addf %63, %68 : vector<1x256xf32>
      %70 = arith.mulf %8, %42 : vector<1x256xf32>
      %71 = arith.addf %69, %70 : vector<1x256xf32>
      %72 = vector.extract_strided_slice %67 {offsets = [0, 0], sizes = [1, 128], strides = [1, 1]} : vector<1x256xf32> to vector<1x128xf32>
      %73 = vector.extract_strided_slice %71 {offsets = [0, 0], sizes = [1, 128], strides = [1, 1]} : vector<1x256xf32> to vector<1x128xf32>
      %74 = vector.extract_strided_slice %67 {offsets = [0, 128], sizes = [1, 128], strides = [1, 1]} : vector<1x256xf32> to vector<1x128xf32>
      %75 = arith.addf %72, %74 : vector<1x128xf32>
      %76 = vector.extract_strided_slice %71 {offsets = [0, 128], sizes = [1, 128], strides = [1, 1]} : vector<1x256xf32> to vector<1x128xf32>
      %77 = arith.addf %73, %76 : vector<1x128xf32>
      %c2_i32 = arith.constant 2 : i32
      %78 = arith.addi %20, %c2_i32 : i32
      %79 = arith.index_cast %78 : i32 to index
      %c0_31 = arith.constant 0 : index
      %80 = vector.load %arg4[%79, %c0_31] : memref<512x128xf32, #tpu.memory_space<vmem>>, vector<1x128xf32>
      tpu.vector_store %arg4[%79, %c0_31], %75 {strides = array<i32>} : memref<512x128xf32, #tpu.memory_space<vmem>>, vector<1x128xf32>,
      %c2_i32_32 = arith.constant 2 : i32
      %81 = arith.addi %20, %c2_i32_32 : i32
      %c1_i32_33 = arith.constant 1 : i32
      %82 = arith.addi %81, %c1_i32_33 : i32
      %83 = arith.index_cast %82 : i32 to index
      %c0_34 = arith.constant 0 : index
      %84 = vector.load %arg4[%83, %c0_34] : memref<512x128xf32, #tpu.memory_space<vmem>>, vector<1x128xf32>
      tpu.vector_store %arg4[%83, %c0_34], %77 {strides = array<i32>} : memref<512x128xf32, #tpu.memory_space<vmem>>, vector<1x128xf32>,
      %85 = vector.extract_strided_slice %34 {offsets = [4, 0], sizes = [1, 256], strides = [1, 1]} : vector<8x256xf32> to vector<1x256xf32>
      %86 = vector.extract_strided_slice %34 {offsets = [5, 0], sizes = [1, 256], strides = [1, 1]} : vector<8x256xf32> to vector<1x256xf32>
      %87 = arith.mulf %4, %85 : vector<1x256xf32>
      %88 = arith.subf %86, %87 : vector<1x256xf32>
      %89 = arith.mulf %4, %71 : vector<1x256xf32>
      %90 = arith.subf %85, %89 : vector<1x256xf32>
      %91 = arith.mulf %6, %67 : vector<1x256xf32>
      %92 = arith.subf %90, %91 : vector<1x256xf32>
      %93 = arith.mulf %7, %71 : vector<1x256xf32>
      %94 = arith.addf %88, %93 : vector<1x256xf32>
      %95 = arith.mulf %8, %67 : vector<1x256xf32>
      %96 = arith.addf %94, %95 : vector<1x256xf32>
      %97 = vector.extract_strided_slice %92 {offsets = [0, 0], sizes = [1, 128], strides = [1, 1]} : vector<1x256xf32> to vector<1x128xf32>
      %98 = vector.extract_strided_slice %96 {offsets = [0, 0], sizes = [1, 128], strides = [1, 1]} : vector<1x256xf32> to vector<1x128xf32>
      %99 = vector.extract_strided_slice %92 {offsets = [0, 128], sizes = [1, 128], strides = [1, 1]} : vector<1x256xf32> to vector<1x128xf32>
      %100 = arith.addf %97, %99 : vector<1x128xf32>
      %101 = vector.extract_strided_slice %96 {offsets = [0, 128], sizes = [1, 128], strides = [1, 1]} : vector<1x256xf32> to vector<1x128xf32>
      %102 = arith.addf %98, %101 : vector<1x128xf32>
      %c4_i32 = arith.constant 4 : i32
      %103 = arith.addi %20, %c4_i32 : i32
      %104 = arith.index_cast %103 : i32 to index
      %c0_35 = arith.constant 0 : index
      %105 = vector.load %arg4[%104, %c0_35] : memref<512x128xf32, #tpu.memory_space<vmem>>, vector<1x128xf32>
      tpu.vector_store %arg4[%104, %c0_35], %100 {strides = array<i32>} : memref<512x128xf32, #tpu.memory_space<vmem>>, vector<1x128xf32>,
      %c4_i32_36 = arith.constant 4 : i32
      %106 = arith.addi %20, %c4_i32_36 : i32
      %c1_i32_37 = arith.constant 1 : i32
      %107 = arith.addi %106, %c1_i32_37 : i32
      %108 = arith.index_cast %107 : i32 to index
      %c0_38 = arith.constant 0 : index
      %109 = vector.load %arg4[%108, %c0_38] : memref<512x128xf32, #tpu.memory_space<vmem>>, vector<1x128xf32>
      tpu.vector_store %arg4[%108, %c0_38], %102 {strides = array<i32>} : memref<512x128xf32, #tpu.memory_space<vmem>>, vector<1x128xf32>,
      %110 = vector.extract_strided_slice %34 {offsets = [6, 0], sizes = [1, 256], strides = [1, 1]} : vector<8x256xf32> to vector<1x256xf32>
      %111 = vector.extract_strided_slice %34 {offsets = [7, 0], sizes = [1, 256], strides = [1, 1]} : vector<8x256xf32> to vector<1x256xf32>
      %112 = arith.mulf %4, %110 : vector<1x256xf32>
      %113 = arith.subf %111, %112 : vector<1x256xf32>
      %114 = arith.mulf %4, %96 : vector<1x256xf32>
      %115 = arith.subf %110, %114 : vector<1x256xf32>
      %116 = arith.mulf %6, %92 : vector<1x256xf32>
      %117 = arith.subf %115, %116 : vector<1x256xf32>
      %118 = arith.mulf %7, %96 : vector<1x256xf32>
      %119 = arith.addf %113, %118 : vector<1x256xf32>
      %120 = arith.mulf %8, %92 : vector<1x256xf32>
      %121 = arith.addf %119, %120 : vector<1x256xf32>
      %122 = vector.extract_strided_slice %117 {offsets = [0, 0], sizes = [1, 128], strides = [1, 1]} : vector<1x256xf32> to vector<1x128xf32>
      %123 = vector.extract_strided_slice %121 {offsets = [0, 0], sizes = [1, 128], strides = [1, 1]} : vector<1x256xf32> to vector<1x128xf32>
      %124 = vector.extract_strided_slice %117 {offsets = [0, 128], sizes = [1, 128], strides = [1, 1]} : vector<1x256xf32> to vector<1x128xf32>
      %125 = arith.addf %122, %124 : vector<1x128xf32>
      %126 = vector.extract_strided_slice %121 {offsets = [0, 128], sizes = [1, 128], strides = [1, 1]} : vector<1x256xf32> to vector<1x128xf32>
      %127 = arith.addf %123, %126 : vector<1x128xf32>
      %c6_i32 = arith.constant 6 : i32
      %128 = arith.addi %20, %c6_i32 : i32
      %129 = arith.index_cast %128 : i32 to index
      %c0_39 = arith.constant 0 : index
      %130 = vector.load %arg4[%129, %c0_39] : memref<512x128xf32, #tpu.memory_space<vmem>>, vector<1x128xf32>
      tpu.vector_store %arg4[%129, %c0_39], %125 {strides = array<i32>} : memref<512x128xf32, #tpu.memory_space<vmem>>, vector<1x128xf32>,
      %c6_i32_40 = arith.constant 6 : i32
      %131 = arith.addi %20, %c6_i32_40 : i32
      %c1_i32_41 = arith.constant 1 : i32
      %132 = arith.addi %131, %c1_i32_41 : i32
      %133 = arith.index_cast %132 : i32 to index
      %c0_42 = arith.constant 0 : index
      %134 = vector.load %arg4[%133, %c0_42] : memref<512x128xf32, #tpu.memory_space<vmem>>, vector<1x128xf32>
      tpu.vector_store %arg4[%133, %c0_42], %127 {strides = array<i32>} : memref<512x128xf32, #tpu.memory_space<vmem>>, vector<1x128xf32>,
      %135 = vector.extract_strided_slice %22 {offsets = [6, 0], sizes = [1, 256], strides = [1, 1]} : vector<8x256xf32> to vector<1x256xf32>
      %136 = vector.extract_strided_slice %22 {offsets = [7, 0], sizes = [1, 256], strides = [1, 1]} : vector<8x256xf32> to vector<1x256xf32>
      scf.yield %136, %135, %121, %117 : vector<1x256xf32>, vector<1x256xf32>, vector<1x256xf32>, vector<1x256xf32>
    }
    %c64_i32_16 = arith.constant 64 : i32
    %c0_17 = arith.constant 0 : index
    %c0_18 = arith.constant 0 : index
    %15 = vector.load %arg5[%c0_17, %c0_18] : memref<4x256xf32, #tpu.memory_space<vmem>>, vector<1x256xf32>
    tpu.vector_store %arg5[%c0_17, %c0_18], %14#0 {strides = array<i32>} : memref<4x256xf32, #tpu.memory_space<vmem>>, vector<1x256xf32>,
    %c1_19 = arith.constant 1 : index
    %c0_20 = arith.constant 0 : index
    %16 = vector.load %arg5[%c1_19, %c0_20] : memref<4x256xf32, #tpu.memory_space<vmem>>, vector<1x256xf32>
    tpu.vector_store %arg5[%c1_19, %c0_20], %14#1 {strides = array<i32>} : memref<4x256xf32, #tpu.memory_space<vmem>>, vector<1x256xf32>,
    %c2_21 = arith.constant 2 : index
    %c0_22 = arith.constant 0 : index
    %17 = vector.load %arg5[%c2_21, %c0_22] : memref<4x256xf32, #tpu.memory_space<vmem>>, vector<1x256xf32>
    tpu.vector_store %arg5[%c2_21, %c0_22], %14#2 {strides = array<i32>} : memref<4x256xf32, #tpu.memory_space<vmem>>, vector<1x256xf32>,
    %c3_23 = arith.constant 3 : index
    %c0_24 = arith.constant 0 : index
    %18 = vector.load %arg5[%c3_23, %c0_24] : memref<4x256xf32, #tpu.memory_space<vmem>>, vector<1x256xf32>
    tpu.vector_store %arg5[%c3_23, %c0_24], %14#3 {strides = array<i32>} : memref<4x256xf32, #tpu.memory_space<vmem>>, vector<1x256xf32>,
    return
  }
  func.func @transform_0(%arg0: i32, %arg1: i32) -> (i32, i32) {
    %c0_i32 = arith.constant 0 : i32
    %c0_i32_0 = arith.constant 0 : i32
    return %c0_i32, %arg0 : i32, i32
  }
  func.func @transform_1(%arg0: i32, %arg1: i32) -> (i32, i32) {
    %c0_i32 = arith.constant 0 : i32
    return %arg1, %arg0 : i32, i32
  }
  func.func @transform_2(%arg0: i32, %arg1: i32) -> (i32, i32) {
    %c0_i32 = arith.constant 0 : i32
    return %arg1, %arg0 : i32, i32
  }
}

</mosaic_0001>

<llo_original>
// kernel: biquad_forward_pallas.1
$region0: #{biquad_forward_pallas.1}
  #allocation0 [shape = 'u32[]', space=smem, size = 0x4, offset = 0x4, fixed_abs, tag = 'smem constant byte address 0x4 - core index']
  #allocation1 [shape = 'u32[144,128]{1,0:T(1,128)}', space=vmem, size = 0x12000, scoped, tag = 'internal scratch']
  #allocation2 [shape = 'f32[4,256]{1,0:T(4,128)}', space=vmem, size = 0x1000, scoped, tag = 'scratch operand']
  %s0 = inlined_call_operand.vmem [shape: f32[8,256], index: 0, kind: input, shape index: {}]
  %s1 = inlined_call_operand.vmem [shape: f32[1024,256], index: 1, kind: input, shape index: {}]
  %s2 = inlined_call_operand.vmem [shape: f32[1024,128], index: 2, kind: output, shape index: {}]
  %s3 = sld [smem:[#allocation0]]
  $region52: #{biquad_forward_pallas.1} parent=0
    _
  %s5 = ssub.s32 1, %s3
  %s6 = scalar_select 0, %s5, %s3
  loop: start=0, step=1, limit=4
  $region2: #{biquad_forward_pallas.1} parent=0 // loop_pre_header
    _
  $region3: #{biquad_forward_pallas.1} parent=0 // loop_header
    %s8 = sphi 0, %s12
    %p9 = scmp.ge.s32.totalorder %s8, 4
    %s15 = sphi 0, %s27
    %s16 = sphi 0, %s23
    %s17 = sphi 0, %s15
    %s18 = sphi 0, %s16
    %s19 = sphi 0, %s17
    %s20 = sphi 0, %s18
    %s30 = sphi 0, %s32
    %s33 = sphi 0, %s30
    %s34 = sphi 0, %s33
    %s50 = sphi 0, %s34
    %s58 = sphi 0, %s60
    %s61 = sphi 0, %s58
    %s62 = sphi 0, %s61
    %s78 = sphi 0, %s62
    %s86 = sphi 0, %s88
    %s89 = sphi 0, %s86
    %s90 = sphi 0, %s89
    %s106 = sphi 0, %s90
  $region4: #{biquad_forward_pallas.1} parent=0 // loop_header_branch
    %11 = sbr.rel (%p9) target = $region8
  $region5: #{biquad_forward_pallas.1} parent=0 // loop_body
    %s13 = ssub.s32 %s8, 1
    %s14 = ssub.s32 %s8, 2
    %s21 = sadd.s32 1, %s16
    %p22 = scmp.ge.s32.totalorder %s21, 2
    %s23 = scalar_select %p22, 0, %s21
    %s24 = sadd.s32 1, %s15
    %s25 = scalar_select %p22, %s24, %s15
    %p26 = scmp.ge.s32.totalorder %s25, 1
    %s27 = scalar_select %p26, 0, %s25
    %s28 = ssub.s32 %s15, %s27
    %p29 = scmp.eq.s32.totalorder %s28, 0
    %s31 = sadd.s32 %s30, 1
    %s32 = scalar_select %p29, %s30, %s31
    %p35 = pneg %p29
    %p36 = scmp.eq.s32.totalorder %s8, 1
    %p37 = por %p35, %p36
    %p38 = scmp.ne.s32.totalorder %s30, %s33
    %p39 = scmp.eq.s32.totalorder %s8, 0
    %p40 = por %p38, %p39
    %p41 = scmp.ne.s32.totalorder %s30, %s33
    %p42 = scmp.eq.s32.totalorder %s13, 1
    %p43 = por %p41, %p42
    %p44 = scmp.ne.s32.totalorder %s33, %s34
    %p45 = scmp.eq.s32.totalorder %s13, 0
    %p46 = por %p44, %p45
    %p47 = scmp.ne.s32.totalorder %s33, %s34
    %p48 = scmp.eq.s32.totalorder %s14, 1
    %p49 = por %p47, %p48
    %p51 = scmp.ne.s32.totalorder %s34, %s50
    %p52 = scmp.eq.s32.totalorder %s14, 0
    %p53 = por %p51, %p52
    %s54 = ssub.s32 %s16, %s23
    %s55 = ssub.s32 %s15, %s27
    %s56 = sor.u32 %s54, %s55
    %p57 = scmp.eq.s32.totalorder %s56, 0
    %s59 = sadd.s32 %s58, 1
    %s60 = scalar_select %p57, %s58, %s59
    %p63 = pneg %p57
    %p64 = scmp.eq.s32.totalorder %s8, 1
    %p65 = por %p63, %p64
    %p66 = scmp.ne.s32.totalorder %s58, %s61
    %p67 = scmp.eq.s32.totalorder %s8, 0
    %p68 = por %p66, %p67
    %p69 = scmp.ne.s32.totalorder %s58, %s61
    %p70 = scmp.eq.s32.totalorder %s13, 1
    %p71 = por %p69, %p70
    %p72 = scmp.ne.s32.totalorder %s61, %s62
    %p73 = scmp.eq.s32.totalorder %s13, 0
    %p74 = por %p72, %p73
    %p75 = scmp.ne.s32.totalorder %s61, %s62
    %p76 = scmp.eq.s32.totalorder %s14, 1
    %p77 = por %p75, %p76
    %p79 = scmp.ne.s32.totalorder %s62, %s78
    %p80 = scmp.eq.s32.totalorder %s14, 0
    %p81 = por %p79, %p80
    %s82 = ssub.s32 %s16, %s23
    %s83 = ssub.s32 %s15, %s27
    %s84 = sor.u32 %s82, %s83
    %p85 = scmp.eq.s32.totalorder %s84, 0
    %s87 = sadd.s32 %s86, 1
    %s88 = scalar_select %p85, %s86, %s87
    %p91 = pneg %p85
    %p92 = scmp.eq.s32.totalorder %s8, 1
    %p93 = por %p91, %p92
    %p94 = scmp.ne.s32.totalorder %s86, %s89
    %p95 = scmp.eq.s32.totalorder %s8, 0
    %p96 = por %p94, %p95
    %p97 = scmp.ne.s32.totalorder %s86, %s89
    %p98 = scmp.eq.s32.totalorder %s13, 1
    %p99 = por %p97, %p98
    %p100 = scmp.ne.s32.totalorder %s89, %s90
    %p101 = scmp.eq.s32.totalorder %s13, 0
    %p102 = por %p100, %p101
    %p103 = scmp.ne.s32.totalorder %s89, %s90
    %p104 = scmp.eq.s32.totalorder %s14, 1
    %p105 = por %p103, %p104
    %p107 = scmp.ne.s32.totalorder %s90, %s106
    %p108 = scmp.eq.s32.totalorder %s14, 0
    %p109 = por %p107, %p108
    %p110 = scmp.le.s32.totalorder 1, %s8
    %p111 = scmp.lt.s32.totalorder %s8, 3
    %p112 = pnand %p110, %p111
    %p113 = pneg %p112
    // Predicated region
    $region9: #{biquad_forward_pallas.1} parent=5 // pred_check
      _
    $region10: #{biquad_forward_pallas.1} parent=5 // pred_check_branch
      %115 = sbr.rel (%p112) target = $region12
    $region11: #{biquad_forward_pallas.1} parent=5 // pred_region
      %s116 = ssub.s32 %s8, 1
      // Predicated region
      $region13: #{biquad_forward_pallas.1} parent=11 // pred_check
        %p117 = pneg %p46
      $region14: #{biquad_forward_pallas.1} parent=11 // pred_check_branch
        %119 = sbr.rel (%p117) target = $region16
      $region15: #{biquad_forward_pallas.1} parent=11 // pred_region
        %s120 = smul.u32 2, %s17
        %p121 = scmp.lt.s32.totalorder %s120, 1
        %s122 = scalar_select %p121, %s120, 1
        %s123 = smul.addr %s122, 8
        %s124 = scalar_lea.vmem %s0, %s123
        %s125 = smul.u32 2, %s17
      $region16: #{biquad_forward_pallas.1} parent=11 // pred_fallthru
        _
    $region12: #{biquad_forward_pallas.1} parent=5 // pred_fallthru
      _
    %p126 = scmp.lt.s32.totalorder %s8, 2
    // Predicated region
    $region17: #{biquad_forward_pallas.1} parent=5 // pred_check
      %p127 = pneg %p126
    $region18: #{biquad_forward_pallas.1} parent=5 // pred_check_branch
      %129 = sbr.rel (%p127) target = $region20
    $region19: #{biquad_forward_pallas.1} parent=5 // pred_region
      // Predicated region
      $region21: #{biquad_forward_pallas.1} parent=19 // pred_check
        %p130 = pneg %p68
      $region22: #{biquad_forward_pallas.1} parent=19 // pred_check_branch
        %132 = sbr.rel (%p130) target = $region24
      $region23: #{biquad_forward_pallas.1} parent=19 // pred_region
        %s133 = smul.u32 64, %s16
        %s134 = smul.u32 2, %s15
        %p135 = scmp.lt.s32.totalorder %s133, 127
        %s136 = scalar_select %p135, %s133, 127
        %p137 = scmp.lt.s32.totalorder %s134, 1
        %s138 = scalar_select %p137, %s134, 1
        %s139 = smul.addr %s136, 2
        %s140 = sadd.s32 %s138, %s139
        %s141 = smul.addr %s140, 8
        %s142 = scalar_lea.vmem %s1, %s141
        %s143 = smul.u32 64, %s16
        %s144 = smul.u32 2, %s15
      $region24: #{biquad_forward_pallas.1} parent=19 // pred_fallthru
        _
    $region20: #{biquad_forward_pallas.1} parent=5 // pred_fallthru
      _
    %p145 = scmp.le.s32.totalorder 1, %s8
    %p146 = scmp.lt.s32.totalorder %s8, 3
    %p147 = pnand %p145, %p146
    %p148 = pneg %p147
    // Predicated region
    $region25: #{biquad_forward_pallas.1} parent=5 // pred_check
      _
    $region26: #{biquad_forward_pallas.1} parent=5 // pred_check_branch
      %150 = sbr.rel (%p147) target = $region28
    $region27: #{biquad_forward_pallas.1} parent=5 // pred_region
      %s151 = ssub.s32 %s8, 1
      %s152 = smul.u32 2, %s17
      %p153 = scmp.lt.s32.totalorder %s152, 1
      %s154 = scalar_select %p153, %s152, 1
      %s155 = smul.addr %s154, 8
      %s156 = scalar_lea.vmem %s0, %s155
      %p157 = pneg %p46
      %p158 = pneg %p43
      %s159 = smul.u32 64, %s18
      %s160 = smul.u32 2, %s17
      %p161 = scmp.lt.s32.totalorder %s159, 127
      %s162 = scalar_select %p161, %s159, 127
      %p163 = scmp.lt.s32.totalorder %s160, 1
      %s164 = scalar_select %p163, %s160, 1
      %s165 = smul.addr %s162, 2
      %s166 = sadd.s32 %s164, %s165
      %s167 = smul.addr %s166, 8
      %s168 = scalar_lea.vmem %s1, %s167
      %p169 = pneg %p74
      %p170 = pneg %p71
      %p171 = pneg %p102
      %p172 = pneg %p99
      %s173 = smul.u32 64, %s18
      %p174 = scmp.lt.s32.totalorder %s173, 127
      %s175 = scalar_select %p174, %s173, 127
      %p176 = scmp.lt.s32.totalorder %s17, 0
      %s177 = scalar_select %p176, %s17, 0
      %s178 = sadd.s32 %s177, %s175
      %s179 = smul.addr %s178, 8
      %s180 = scalar_lea.vmem %s2, %s179
      %s181 = smul.u32 2, %s17
      %p182 = scmp.lt.s32.totalorder %s181, 1
      %s183 = scalar_select %p182, %s181, 1
      %s184 = smul.addr %s183, 8
      %s185 = scalar_lea.vmem %s0, %s184
      %s186 = smul.u32 2, %s17
      %s187 = smul.u32 64, %s18
      %s188 = smul.u32 2, %s17
      %p189 = scmp.lt.s32.totalorder %s187, 127
      %s190 = scalar_select %p189, %s187, 127
      %p191 = scmp.lt.s32.totalorder %s188, 1
      %s192 = scalar_select %p191, %s188, 1
      %s193 = smul.addr %s190, 2
      %s194 = sadd.s32 %s192, %s193
      %s195 = smul.addr %s194, 8
      %s196 = scalar_lea.vmem %s1, %s195
      %s197 = smul.u32 64, %s18
      %s198 = smul.u32 2, %s17
      %s199 = smul.u32 64, %s18
      %p200 = scmp.lt.s32.totalorder %s199, 127
      %s201 = scalar_select %p200, %s199, 127
      %p202 = scmp.lt.s32.totalorder %s17, 0
      %s203 = scalar_select %p202, %s17, 0
      %s204 = sadd.s32 %s203, %s201
      %s205 = smul.addr %s204, 8
      %s206 = scalar_lea.vmem %s2, %s205
      %s207 = smul.u32 64, %s18
      %p208 = scmp.eq.s32.totalorder %s18, 0
      // Predicated region
      $region29: #{biquad_forward_pallas.1} parent=27 // pred_check
        %p209 = pneg %p208
      $region30: #{biquad_forward_pallas.1} parent=27 // pred_check_branch
        %211 = sbr.rel (%p209) target = $region32
      $region31: #{biquad_forward_pallas.1} parent=27 // pred_region
        %212 = vst [vmem:[#allocation2] sm:$0xff] 0.0
      $region32: #{biquad_forward_pallas.1} parent=27 // pred_fallthru
        _
      %v213 = vld [vmem:[%s185] ss:$8 sm:$0x3]
      %s214 = scalar_lea.vmem %s185, 1
      %v215 = vld [vmem:[%s214] ss:$8 sm:$0x3]
      %s216 = scalar_lea.vmem %s185, 2
      %v217 = vld [vmem:[%s216] ss:$8 sm:$0x3]
      %s218 = scalar_lea.vmem %s185, 3
      %v219 = vld [vmem:[%s218] ss:$8 sm:$0x3]
      %s220 = scalar_lea.vmem %s185, 4
      %v221 = vld [vmem:[%s220] ss:$8 sm:$0x3]
      %s222 = scalar_lea.vmem %s185, 5
      %v223 = vld [vmem:[%s222] ss:$8 sm:$0x3]
      %v224 = vld [vmem:[#allocation2] ss:$4 sm:$0x3]
      %s225 = scalar_lea.vmem [#allocation2], 1
      %v226 = vld [vmem:[%s225] ss:$4 sm:$0x3]
      %s227 = scalar_lea.vmem [#allocation2], 2
      %v228 = vld [vmem:[%s227] ss:$4 sm:$0x3]
      %s229 = scalar_lea.vmem [#allocation2], 3
      %v230 = vld [vmem:[%s229] ss:$4 sm:$0x3]
      %v232 = vlaneseq
      %v233 = vshrl.u32 %v232, 7
      %v234 = vsub.s32 0, %v233
      %v235 = vrot.slane %v224, %v234
      %v236 = vlaneseq
      %v237 = vshrl.u32 %v236, 7
      %v238 = vsub.s32 1, %v237
      %v239 = vrot.slane %v224, %v238
      %v243 = vlaneseq
      %v244 = vshrl.u32 %v243, 7
      %v245 = vsub.s32 0, %v244
      %v246 = vrot.slane %v226, %v245
      %v247 = vlaneseq
      %v248 = vshrl.u32 %v247, 7
      %v249 = vsub.s32 1, %v248
      %v250 = vrot.slane %v226, %v249
      %v254 = vlaneseq
      %v255 = vshrl.u32 %v254, 7
      %v256 = vsub.s32 0, %v255
      %v257 = vrot.slane %v228, %v256
      %v258 = vlaneseq
      %v259 = vshrl.u32 %v258, 7
      %v260 = vsub.s32 1, %v259
      %v261 = vrot.slane %v228, %v260
      %v265 = vlaneseq
      %v266 = vshrl.u32 %v265, 7
      %v267 = vsub.s32 0, %v266
      %v268 = vrot.slane %v230, %v267
      %v269 = vlaneseq
      %v270 = vshrl.u32 %v269, 7
      %v271 = vsub.s32 1, %v270
      %v272 = vrot.slane %v230, %v271
      loop: start=0, step=1, limit=64
      $region33: #{biquad_forward_pallas.1} parent=27 // loop_pre_header
        _
      $region34: #{biquad_forward_pallas.1} parent=27 // loop_header
        %s276 = sphi 0, %s280
        %p277 = scmp.ge.s32.totalorder %s276, 64
        %v281 = vphi %v235, %v299
        %v282 = vphi %v239, %v300
        %v283 = vphi %v246, %v312
        %v284 = vphi %v250, %v313
        %v285 = vphi %v257, %v864
        %v286 = vphi %v261, %v865
        %v287 = vphi %v268, %v870
        %v288 = vphi %v272, %v871
      $region35: #{biquad_forward_pallas.1} parent=27 // loop_header_branch
        %279 = sbr.rel (%p277) target = $region39
      $region36: #{biquad_forward_pallas.1} parent=27 // loop_body
        %s289 = smul.u32 %s276, 8
        %s290 = sshra.s32 %s289, 3
        %s291 = sand.u32 %s289, 7
        %s292 = smul.u32 %s290, 2
        %s293 = smul.addr %s292, 8
        %s294 = scalar_lea.vmem %s196, %s293
        %v295 = vld [vmem:[%s294] sm:$0xff]
        %v296 = vld [vmem:[%s294 + $0x8] sm:$0xff]
        %v299 = vrot.slane %v295, 7
        %v300 = vrot.slane %v296, 7
        %vm303 = vcmask 1040384
        %v304 = vsel %vm303, %v281, %v299
        %v305 = vsel %vm303, %v282, %v300
        %v308 = vrot.slane %v281, 7
        %v309 = vrot.slane %v282, 7
        %v312 = vrot.slane %v295, 6
        %v313 = vrot.slane %v296, 6
        %v316 = vsel %vm303, %v283, %v308
        %v317 = vsel %vm303, %v284, %v309
        %vm318 = vcmask 1041408
        %v319 = vsel %vm318, %v316, %v312
        %v320 = vsel %vm318, %v317, %v313
        %v322 = vlaneseq
        %v323 = vshrl.u32 %v322, 7
        %v324 = vsub.s32 0, %v323
        %v325 = vrot.slane %v213, %v324
        %v326 = vlaneseq
        %v327 = vshrl.u32 %v326, 7
        %v328 = vsub.s32 1, %v327
        %v329 = vrot.slane %v213, %v328
        %v332 = vmul.f32 %v325, %v295
        %v333 = vmul.f32 %v329, %v296
        %v335 = vlaneseq
        %v336 = vshrl.u32 %v335, 7
        %v337 = vsub.s32 0, %v336
        %v338 = vrot.slane %v215, %v337
        %v339 = vlaneseq
        %v340 = vshrl.u32 %v339, 7
        %v341 = vsub.s32 1, %v340
        %v342 = vrot.slane %v215, %v341
        %v345 = vmul.f32 %v338, %v304
        %v346 = vmul.f32 %v342, %v305
        %v347 = vadd.f32 %v332, %v345
        %v348 = vadd.f32 %v333, %v346
        %v350 = vlaneseq
        %v351 = vshrl.u32 %v350, 7
        %v352 = vsub.s32 0, %v351
        %v353 = vrot.slane %v217, %v352
        %v354 = vlaneseq
        %v355 = vshrl.u32 %v354, 7
        %v356 = vsub.s32 1, %v355
        %v357 = vrot.slane %v217, %v356
        %v360 = vmul.f32 %v353, %v319
        %v361 = vmul.f32 %v357, %v320
        %v362 = vadd.f32 %v347, %v360
        %v363 = vadd.f32 %v348, %v361
        %v366 = vcombine.low %v362, %v363
        %v368 = vunpack.c.l.s4 1966171168
        %v369 = vunpack.c.0.s8 %v368
        %v370 = vlaneseq
        %v371 = vshrl.u32 %v370, 7
        %v372 = vsub.s32 %v369, %v371
        %v373 = vrot.slane %v366, %v372
        %v375 = vunpack.c.l.s4 1966171168
        %v376 = vunpack.c.0.s8 %v375
        %v377 = vlaneseq
        %v378 = vshrl.u32 %v377, 7
        %v379 = vsub.s32 %v376, %v378
        %v380 = vrot.slane %v373, %v379
        %v382 = vmul.f32 %v215, %v380
        %v384 = vlaneseq
        %v385 = vshrl.u32 %v384, 7
        %v386 = vsub.s32 0, %v385
        %v387 = vrot.slane %v382, %v386
        %v388 = vlaneseq
        %v389 = vshrl.u32 %v388, 7
        %v390 = vsub.s32 1, %v389
        %v391 = vrot.slane %v382, %v390
        %v394 = vsub.f32 %v362, %v387
        %v395 = vsub.f32 %v363, %v391
        %v398 = vcombine.low %v285, %v286
        %v400 = vunpack.c.l.s4 1966171168
        %v401 = vunpack.c.0.s8 %v400
        %v402 = vlaneseq
        %v403 = vshrl.u32 %v402, 7
        %v404 = vsub.s32 %v401, %v403
        %v405 = vrot.slane %v398, %v404
        %v407 = vunpack.c.l.s4 1966171168
        %v408 = vunpack.c.0.s8 %v407
        %v409 = vlaneseq
        %v410 = vshrl.u32 %v409, 7
        %v411 = vsub.s32 %v408, %v410
        %v412 = vrot.slane %v405, %v411
        %v414 = vmul.f32 %v215, %v412
        %v416 = vlaneseq
        %v417 = vshrl.u32 %v416, 7
        %v418 = vsub.s32 0, %v417
        %v419 = vrot.slane %v414, %v418
        %v420 = vlaneseq
        %v421 = vshrl.u32 %v420, 7
        %v422 = vsub.s32 1, %v421
        %v423 = vrot.slane %v414, %v422
        %v426 = vsub.f32 %v362, %v419
        %v427 = vsub.f32 %v363, %v423
        %v430 = vcombine.low %v287, %v288
        %v432 = vunpack.c.l.s4 1966171168
        %v433 = vunpack.c.0.s8 %v432
        %v434 = vlaneseq
        %v435 = vshrl.u32 %v434, 7
        %v436 = vsub.s32 %v433, %v435
        %v437 = vrot.slane %v430, %v436
        %v439 = vunpack.c.l.s4 1966171168
        %v440 = vunpack.c.0.s8 %v439
        %v441 = vlaneseq
        %v442 = vshrl.u32 %v441, 7
        %v443 = vsub.s32 %v440, %v442
        %v444 = vrot.slane %v437, %v443
        %v446 = vmul.f32 %v219, %v444
        %v448 = vlaneseq
        %v449 = vshrl.u32 %v448, 7
        %v450 = vsub.s32 0, %v449
        %v451 = vrot.slane %v446, %v450
        %v452 = vlaneseq
        %v453 = vshrl.u32 %v452, 7
        %v454 = vsub.s32 1, %v453
        %v455 = vrot.slane %v446, %v454
        %v458 = vsub.f32 %v426, %v451
        %v459 = vsub.f32 %v427, %v455
        %v460 = vmul.f32 %v221, %v412
        %v462 = vlaneseq
        %v463 = vshrl.u32 %v462, 7
        %v464 = vsub.s32 0, %v463
        %v465 = vrot.slane %v460, %v464
        %v466 = vlaneseq
        %v467 = vshrl.u32 %v466, 7
        %v468 = vsub.s32 1, %v467
        %v469 = vrot.slane %v460, %v468
        %v472 = vadd.f32 %v394, %v465
        %v473 = vadd.f32 %v395, %v469
        %v474 = vmul.f32 %v223, %v444
        %v476 = vlaneseq
        %v477 = vshrl.u32 %v476, 7
        %v478 = vsub.s32 0, %v477
        %v479 = vrot.slane %v474, %v478
        %v480 = vlaneseq
        %v481 = vshrl.u32 %v480, 7
        %v482 = vsub.s32 1, %v481
        %v483 = vrot.slane %v474, %v482
        %v486 = vadd.f32 %v472, %v479
        %v487 = vadd.f32 %v473, %v483
        %v488 = vadd.f32 %v458, %v459
        %v489 = vadd.f32 %v486, %v487
        %s490 = scalar_lea.vmem %s206, %s289
        %491 = vst [vmem:[%s490] sm:$0x1] %v488
        %s492 = sadd.s32 %s289, 1
        %s493 = scalar_lea.vmem %s206, %s492
        %494 = vst [vmem:[%s493 - $0x1] sm:$0x2] %v489
        %v495 = vcombine.high %v380, %v380
        %v497 = vmul.f32 %v215, %v495
        %v499 = vlaneseq
        %v500 = vshrl.u32 %v499, 7
        %v501 = vsub.s32 0, %v500
        %v502 = vrot.slane %v497, %v501
        %v503 = vlaneseq
        %v504 = vshrl.u32 %v503, 7
        %v505 = vsub.s32 1, %v504
        %v506 = vrot.slane %v497, %v505
        %v509 = vsub.f32 %v362, %v502
        %v510 = vsub.f32 %v363, %v506
        %v513 = vcombine.low %v486, %v487
        %v515 = vunpack.c.l.s4 1966171168
        %v516 = vunpack.c.0.s8 %v515
        %v517 = vlaneseq
        %v518 = vshrl.u32 %v517, 7
        %v519 = vsub.s32 %v516, %v518
        %v520 = vrot.slane %v513, %v519
        %v521 = vcombine.high %v520, %v520
        %v523 = vunpack.c.l.s4 1966171168
        %v524 = vunpack.c.0.s8 %v523
        %v525 = vlaneseq
        %v526 = vshrl.u32 %v525, 7
        %v527 = vsub.s32 %v524, %v526
        %v528 = vrot.slane %v521, %v527
        %v530 = vmul.f32 %v215, %v528
        %v532 = vlaneseq
        %v533 = vshrl.u32 %v532, 7
        %v534 = vsub.s32 0, %v533
        %v535 = vrot.slane %v530, %v534
        %v536 = vlaneseq
        %v537 = vshrl.u32 %v536, 7
        %v538 = vsub.s32 1, %v537
        %v539 = vrot.slane %v530, %v538
        %v542 = vsub.f32 %v362, %v535
        %v543 = vsub.f32 %v363, %v539
        %v546 = vcombine.low %v458, %v459
        %v548 = vunpack.c.l.s4 1966171168
        %v549 = vunpack.c.0.s8 %v548
        %v550 = vlaneseq
        %v551 = vshrl.u32 %v550, 7
        %v552 = vsub.s32 %v549, %v551
        %v553 = vrot.slane %v546, %v552
        %v555 = vunpack.c.l.s4 1966171168
        %v556 = vunpack.c.0.s8 %v555
        %v557 = vlaneseq
        %v558 = vshrl.u32 %v557, 7
        %v559 = vsub.s32 %v556, %v558
        %v560 = vrot.slane %v553, %v559
        %v562 = vmul.f32 %v219, %v560
        %v564 = vlaneseq
        %v565 = vshrl.u32 %v564, 7
        %v566 = vsub.s32 0, %v565
        %v567 = vrot.slane %v562, %v566
        %v568 = vlaneseq
        %v569 = vshrl.u32 %v568, 7
        %v570 = vsub.s32 1, %v569
        %v571 = vrot.slane %v562, %v570
        %v574 = vsub.f32 %v542, %v567
        %v575 = vsub.f32 %v543, %v571
        %v576 = vmul.f32 %v221, %v528
        %v578 = vlaneseq
        %v579 = vshrl.u32 %v578, 7
        %v580 = vsub.s32 0, %v579
        %v581 = vrot.slane %v576, %v580
        %v582 = vlaneseq
        %v583 = vshrl.u32 %v582, 7
        %v584 = vsub.s32 1, %v583
        %v585 = vrot.slane %v576, %v584
        %v588 = vadd.f32 %v509, %v581
        %v589 = vadd.f32 %v510, %v585
        %v590 = vmul.f32 %v223, %v560
        %v592 = vlaneseq
        %v593 = vshrl.u32 %v592, 7
        %v594 = vsub.s32 0, %v593
        %v595 = vrot.slane %v590, %v594
        %v596 = vlaneseq
        %v597 = vshrl.u32 %v596, 7
        %v598 = vsub.s32 1, %v597
        %v599 = vrot.slane %v590, %v598
        %v602 = vadd.f32 %v588, %v595
        %v603 = vadd.f32 %v589, %v599
        %v604 = vadd.f32 %v574, %v575
        %v605 = vadd.f32 %v602, %v603
        %s606 = sadd.s32 %s289, 2
        %s607 = scalar_lea.vmem %s206, %s606
        %608 = vst [vmem:[%s607 - $0x2] sm:$0x4] %v604
        %s609 = sadd.s32 %s289, 3
        %s610 = scalar_lea.vmem %s206, %s609
        %611 = vst [vmem:[%s610 - $0x3] sm:$0x8] %v605
        %v612 = vcombine.high %v362, %v363
        %v614 = vunpack.c.l.s4 1966171168
        %v615 = vunpack.c.0.s8 %v614
        %v616 = vlaneseq
        %v617 = vshrl.u32 %v616, 7
        %v618 = vsub.s32 %v615, %v617
        %v619 = vrot.slane %v612, %v618
        %v621 = vunpack.c.l.s4 1966171168
        %v622 = vunpack.c.0.s8 %v621
        %v623 = vlaneseq
        %v624 = vshrl.u32 %v623, 7
        %v625 = vsub.s32 %v622, %v624
        %v626 = vrot.slane %v619, %v625
        %v628 = vmul.f32 %v215, %v626
        %v630 = vlaneseq
        %v631 = vshrl.u32 %v630, 7
        %v632 = vsub.s32 0, %v631
        %v633 = vrot.slane %v628, %v632
        %v634 = vlaneseq
        %v635 = vshrl.u32 %v634, 7
        %v636 = vsub.s32 1, %v635
        %v637 = vrot.slane %v628, %v636
        %v640 = vsub.f32 %v362, %v633
        %v641 = vsub.f32 %v363, %v637
        %v644 = vcombine.low %v602, %v603
        %v646 = vunpack.c.l.s4 1966171168
        %v647 = vunpack.c.0.s8 %v646
        %v648 = vlaneseq
        %v649 = vshrl.u32 %v648, 7
        %v650 = vsub.s32 %v647, %v649
        %v651 = vrot.slane %v644, %v650
        %v652 = vcombine.high %v651, %v651
        %v654 = vunpack.c.l.s4 1966171168
        %v655 = vunpack.c.0.s8 %v654
        %v656 = vlaneseq
        %v657 = vshrl.u32 %v656, 7
        %v658 = vsub.s32 %v655, %v657
        %v659 = vrot.slane %v652, %v658
        %v660 = vcombine.high %v659, %v659
        %v662 = vmul.f32 %v215, %v660
        %v664 = vlaneseq
        %v665 = vshrl.u32 %v664, 7
        %v666 = vsub.s32 0, %v665
        %v667 = vrot.slane %v662, %v666
        %v668 = vlaneseq
        %v669 = vshrl.u32 %v668, 7
        %v670 = vsub.s32 1, %v669
        %v671 = vrot.slane %v662, %v670
        %v674 = vsub.f32 %v362, %v667
        %v675 = vsub.f32 %v363, %v671
        %v678 = vcombine.low %v574, %v575
        %v680 = vunpack.c.l.s4 1966171168
        %v681 = vunpack.c.0.s8 %v680
        %v682 = vlaneseq
        %v683 = vshrl.u32 %v682, 7
        %v684 = vsub.s32 %v681, %v683
        %v685 = vrot.slane %v678, %v684
        %v687 = vunpack.c.l.s4 1966171168
        %v688 = vunpack.c.0.s8 %v687
        %v689 = vlaneseq
        %v690 = vshrl.u32 %v689, 7
        %v691 = vsub.s32 %v688, %v690
        %v692 = vrot.slane %v685, %v691
        %v693 = vcombine.high %v692, %v692
        %v695 = vmul.f32 %v219, %v693
        %v697 = vlaneseq
        %v698 = vshrl.u32 %v697, 7
        %v699 = vsub.s32 0, %v698
        %v700 = vrot.slane %v695, %v699
        %v701 = vlaneseq
        %v702 = vshrl.u32 %v701, 7
        %v703 = vsub.s32 1, %v702
        %v704 = vrot.slane %v695, %v703
        %v707 = vsub.f32 %v674, %v700
        %v708 = vsub.f32 %v675, %v704
        %v709 = vmul.f32 %v221, %v660
        %v711 = vlaneseq
        %v712 = vshrl.u32 %v711, 7
        %v713 = vsub.s32 0, %v712
        %v714 = vrot.slane %v709, %v713
        %v715 = vlaneseq
        %v716 = vshrl.u32 %v715, 7
        %v717 = vsub.s32 1, %v716
        %v718 = vrot.slane %v709, %v717
        %v721 = vadd.f32 %v640, %v714
        %v722 = vadd.f32 %v641, %v718
        %v723 = vmul.f32 %v223, %v693
        %v725 = vlaneseq
        %v726 = vshrl.u32 %v725, 7
        %v727 = vsub.s32 0, %v726
        %v728 = vrot.slane %v723, %v727
        %v729 = vlaneseq
        %v730 = vshrl.u32 %v729, 7
        %v731 = vsub.s32 1, %v730
        %v732 = vrot.slane %v723, %v731
        %v735 = vadd.f32 %v721, %v728
        %v736 = vadd.f32 %v722, %v732
        %v737 = vadd.f32 %v707, %v708
        %v738 = vadd.f32 %v735, %v736
        %s739 = sadd.s32 %s289, 4
        %s740 = scalar_lea.vmem %s206, %s739
        %741 = vst [vmem:[%s740 - $0x4] sm:$0x10] %v737
        %s742 = sadd.s32 %s289, 5
        %s743 = scalar_lea.vmem %s206, %s742
        %744 = vst [vmem:[%s743 - $0x5] sm:$0x20] %v738
        %v745 = vcombine.high %v626, %v626
        %v747 = vmul.f32 %v215, %v745
        %v749 = vlaneseq
        %v750 = vshrl.u32 %v749, 7
        %v751 = vsub.s32 0, %v750
        %v752 = vrot.slane %v747, %v751
        %v753 = vlaneseq
        %v754 = vshrl.u32 %v753, 7
        %v755 = vsub.s32 1, %v754
        %v756 = vrot.slane %v747, %v755
        %v759 = vsub.f32 %v362, %v752
        %v760 = vsub.f32 %v363, %v756
        %v763 = vcombine.high %v735, %v736
        %v765 = vunpack.c.l.s4 1966171168
        %v766 = vunpack.c.0.s8 %v765
        %v767 = vlaneseq
        %v768 = vshrl.u32 %v767, 7
        %v769 = vsub.s32 %v766, %v768
        %v770 = vrot.slane %v763, %v769
        %v771 = vcombine.high %v770, %v770
        %v773 = vunpack.c.l.s4 1966171168
        %v774 = vunpack.c.0.s8 %v773
        %v775 = vlaneseq
        %v776 = vshrl.u32 %v775, 7
        %v777 = vsub.s32 %v774, %v776
        %v778 = vrot.slane %v771, %v777
        %v780 = vmul.f32 %v215, %v778
        %v782 = vlaneseq
        %v783 = vshrl.u32 %v782, 7
        %v784 = vsub.s32 0, %v783
        %v785 = vrot.slane %v780, %v784
        %v786 = vlaneseq
        %v787 = vshrl.u32 %v786, 7
        %v788 = vsub.s32 1, %v787
        %v789 = vrot.slane %v780, %v788
        %v792 = vsub.f32 %v362, %v785
        %v793 = vsub.f32 %v363, %v789
        %v796 = vcombine.high %v707, %v708
        %v798 = vunpack.c.l.s4 1966171168
        %v799 = vunpack.c.0.s8 %v798
        %v800 = vlaneseq
        %v801 = vshrl.u32 %v800, 7
        %v802 = vsub.s32 %v799, %v801
        %v803 = vrot.slane %v796, %v802
        %v805 = vunpack.c.l.s4 1966171168
        %v806 = vunpack.c.0.s8 %v805
        %v807 = vlaneseq
        %v808 = vshrl.u32 %v807, 7
        %v809 = vsub.s32 %v806, %v808
        %v810 = vrot.slane %v803, %v809
        %v812 = vmul.f32 %v219, %v810
        %v814 = vlaneseq
        %v815 = vshrl.u32 %v814, 7
        %v816 = vsub.s32 0, %v815
        %v817 = vrot.slane %v812, %v816
        %v818 = vlaneseq
        %v819 = vshrl.u32 %v818, 7
        %v820 = vsub.s32 1, %v819
        %v821 = vrot.slane %v812, %v820
        %v824 = vsub.f32 %v792, %v817
        %v825 = vsub.f32 %v793, %v821
        %v826 = vmul.f32 %v221, %v778
        %v828 = vlaneseq
        %v829 = vshrl.u32 %v828, 7
        %v830 = vsub.s32 0, %v829
        %v831 = vrot.slane %v826, %v830
        %v832 = vlaneseq
        %v833 = vshrl.u32 %v832, 7
        %v834 = vsub.s32 1, %v833
        %v835 = vrot.slane %v826, %v834
        %v838 = vadd.f32 %v759, %v831
        %v839 = vadd.f32 %v760, %v835
        %v840 = vmul.f32 %v223, %v810
        %v842 = vlaneseq
        %v843 = vshrl.u32 %v842, 7
        %v844 = vsub.s32 0, %v843
        %v845 = vrot.slane %v840, %v844
        %v846 = vlaneseq
        %v847 = vshrl.u32 %v846, 7
        %v848 = vsub.s32 1, %v847
        %v849 = vrot.slane %v840, %v848
        %v852 = vadd.f32 %v838, %v845
        %v853 = vadd.f32 %v839, %v849
        %v854 = vadd.f32 %v824, %v825
        %v855 = vadd.f32 %v852, %v853
        %s856 = sadd.s32 %s289, 6
        %s857 = scalar_lea.vmem %s206, %s856
        %858 = vst [vmem:[%s857 - $0x6] sm:$0x40] %v854
        %s859 = sadd.s32 %s289, 7
        %s860 = scalar_lea.vmem %s206, %s859
        %861 = vst [vmem:[%s860 - $0x7] sm:$0x80] %v855
        %v864 = vrot.slane %v852, 7
        %v865 = vrot.slane %v853, 7
        %v870 = vrot.slane %v824, 6
        %v871 = vrot.slane %v825, 6
      $region37: #{biquad_forward_pallas.1} parent=27 // loop_footer
        %s280 = sadd.s32 1, %s276
      $region38: #{biquad_forward_pallas.1} parent=27 // loop_footer_branch
        %275 = sbr.rel target = $region34
      $region39: #{biquad_forward_pallas.1} parent=27 // loop_exit
        _
      %v876 = vcombine.low %v281, %v282
      %v878 = vunpack.c.l.s4 1966171168
      %v879 = vunpack.c.0.s8 %v878
      %v880 = vlaneseq
      %v881 = vshrl.u32 %v880, 7
      %v882 = vsub.s32 %v879, %v881
      %v883 = vrot.slane %v876, %v882
      %v885 = vunpack.c.l.s4 1966171168
      %v886 = vunpack.c.0.s8 %v885
      %v887 = vlaneseq
      %v888 = vshrl.u32 %v887, 7
      %v889 = vsub.s32 %v886, %v888
      %v890 = vrot.slane %v883, %v889
      %v892 = vlaneseq
      %vm893 = vcmp.ge.s32.totalorder %v892, 0
      %vm894 = vcmp.lt.s32.totalorder %v892, 256
      %vm895 = vmand %vm893, %vm894
      %896 = vst.msk [vmem:[#allocation2] ss:$4 sm:$0x3] %vm895, %v890
      %v899 = vcombine.low %v283, %v284
      %v901 = vunpack.c.l.s4 1966171168
      %v902 = vunpack.c.0.s8 %v901
      %v903 = vlaneseq
      %v904 = vshrl.u32 %v903, 7
      %v905 = vsub.s32 %v902, %v904
      %v906 = vrot.slane %v899, %v905
      %v908 = vunpack.c.l.s4 1966171168
      %v909 = vunpack.c.0.s8 %v908
      %v910 = vlaneseq
      %v911 = vshrl.u32 %v910, 7
      %v912 = vsub.s32 %v909, %v911
      %v913 = vrot.slane %v906, %v912
      %915 = vst.msk [vmem:[%s225] ss:$4 sm:$0x3] %vm895, %v913
      %v918 = vcombine.low %v285, %v286
      %v920 = vunpack.c.l.s4 1966171168
      %v921 = vunpack.c.0.s8 %v920
      %v922 = vlaneseq
      %v923 = vshrl.u32 %v922, 7
      %v924 = vsub.s32 %v921, %v923
      %v925 = vrot.slane %v918, %v924
      %v927 = vunpack.c.l.s4 1966171168
      %v928 = vunpack.c.0.s8 %v927
      %v929 = vlaneseq
      %v930 = vshrl.u32 %v929, 7
      %v931 = vsub.s32 %v928, %v930
      %v932 = vrot.slane %v925, %v931
      %934 = vst.msk [vmem:[%s227] ss:$4 sm:$0x3] %vm895, %v932
      %v937 = vcombine.low %v287, %v288
      %v939 = vunpack.c.l.s4 1966171168
      %v940 = vunpack.c.0.s8 %v939
      %v941 = vlaneseq
      %v942 = vshrl.u32 %v941, 7
      %v943 = vsub.s32 %v940, %v942
      %v944 = vrot.slane %v937, %v943
      %v946 = vunpack.c.l.s4 1966171168
      %v947 = vunpack.c.0.s8 %v946
      %v948 = vlaneseq
      %v949 = vshrl.u32 %v948, 7
      %v950 = vsub.s32 %v947, %v949
      %v951 = vrot.slane %v944, %v950
      %953 = vst.msk [vmem:[%s229] ss:$4 sm:$0x3] %vm895, %v951
      %s954 = smul.u32 64, %s18
      %p955 = scmp.lt.s32.totalorder %s954, 127
      %s956 = scalar_select %p955, %s954, 127
      %p957 = scmp.lt.s32.totalorder %s17, 0
      %s958 = scalar_select %p957, %s17, 0
      %s959 = sadd.s32 %s958, %s956
      %s960 = smul.addr %s959, 8
      %s961 = scalar_lea.vmem %s2, %s960
      // Predicated region
      $region40: #{biquad_forward_pallas.1} parent=27 // pred_check
        %p962 = pneg %p99
      $region41: #{biquad_forward_pallas.1} parent=27 // pred_check_branch
        %964 = sbr.rel (%p962) target = $region43
      $region42: #{biquad_forward_pallas.1} parent=27 // pred_region
        %s965 = smul.u32 64, %s18
      $region43: #{biquad_forward_pallas.1} parent=27 // pred_fallthru
        _
    $region28: #{biquad_forward_pallas.1} parent=5 // pred_fallthru
      _
    %p966 = scmp.le.s32.totalorder 2, %s8
    // Predicated region
    $region44: #{biquad_forward_pallas.1} parent=5 // pred_check
      %p967 = pneg %p966
    $region45: #{biquad_forward_pallas.1} parent=5 // pred_check_branch
      %969 = sbr.rel (%p967) target = $region47
    $region46: #{biquad_forward_pallas.1} parent=5 // pred_region
      %s970 = ssub.s32 %s8, 2
      // Predicated region
      $region48: #{biquad_forward_pallas.1} parent=46 // pred_check
        %p971 = pneg %p105
      $region49: #{biquad_forward_pallas.1} parent=46 // pred_check_branch
        %973 = sbr.rel (%p971) target = $region51
      $region50: #{biquad_forward_pallas.1} parent=46 // pred_region
        %s974 = smul.u32 64, %s20
        %p975 = scmp.lt.s32.totalorder %s974, 127
        %s976 = scalar_select %p975, %s974, 127
        %p977 = scmp.lt.s32.totalorder %s19, 0
        %s978 = scalar_select %p977, %s19, 0
        %s979 = sadd.s32 %s978, %s976
        %s980 = smul.addr %s979, 8
        %s981 = scalar_lea.vmem %s2, %s980
      $region51: #{biquad_forward_pallas.1} parent=46 // pred_fallthru
        _
    $region47: #{biquad_forward_pallas.1} parent=5 // pred_fallthru
      _
  $region6: #{biquad_forward_pallas.1} parent=0 // loop_footer
    %s12 = sadd.s32 1, %s8
  $region7: #{biquad_forward_pallas.1} parent=0 // loop_footer_branch
    %7 = sbr.rel target = $region3
  $region8: #{biquad_forward_pallas.1} parent=0 // loop_exit
    _

</llo_original>
